<compile_context>
chip_gen: v7x
topology: tpu7x:2x2x1
jax: 0.10.0
libtpu: 0.0.40
codegen_flags: <defaults>
</compile_context>

<pallas_src>
import functools

import jax
import jax.numpy as jnp
import numpy as np
from jax.experimental import pallas as pl
from jax.experimental.pallas import tpu as pltpu  # noqa: F401  (TPU backend assumed)

# ---------------------------------------------------------------------------
# Model sizes (small, consistent with the module's constructor arguments).
# ---------------------------------------------------------------------------
D_UF, D_GF, D_CF = 6, 5, 5
D_IN = D_UF + D_GF + D_CF            # encoder / transformer input width (16)
D_SKILL = 4                          # == len(SKILLS)
ATT_HIDDEN = 32                      # ATT_HIDDEN_SIZE
STATE_HIDDEN = 32                    # STATE_HIDDEN_SIZE
SEQ_LEN = 8                          # SQUENCE_LENGTH (length of `questions`)
N_USERS, N_GAMES = 5, 10
EPS = 1e-5
NEG_SLOPE = 0.01                     # torch.nn.LeakyReLU default

SD = D_SKILL * D_IN                  # 64  stacked (all-skill) input width
SLAB_W = 128                         # lane width of every packed slab

# W slab row offsets (464 rows total; all offsets are multiples of 8).
R_W1 = 0                                      # 16 rows : folded dense encoder layer-1
R_WET = R_W1 + D_IN                           # 16      : co-packed enc_w2(+expand) & tr_w4
R_TW1 = R_WET + D_SKILL * ATT_HIDDEN          # 144     : tr_w1 block-diagonal (64 rows)
R_TW2 = R_TW1 + SD                            # 208     : tr_w2 block-diagonal (128 rows)
R_TW3 = R_TW2 + D_SKILL * STATE_HIDDEN        # 336     : tr_w3 block-diagonal (128 rows)
R_END = R_TW3 + D_SKILL * STATE_HIDDEN        # 464

# Column layout of the co-packed WET block (rows R_WET:R_TW1).
C_ATTE = 0                  # 64 lanes: skill-expanded attention (aligned with x_t copies)
C_ATT = SD                  # 4 lanes : compact per-skill attention
C_CS = SD + D_SKILL         # 4 lanes : per-skill cognitive state (tr_w4)

# V slab rows (bias / folded-affine vectors, one per sublane).
V_EB1, V_EB2, V_TB1, V_TB2, V_TB3 = range(5)  # rows 5..7 are zero padding

# Activation slab lane offsets.
A_X = 0                     # 64: 4 lane-copies of encoder_inputs
A_DIFF = 64                 # 4
A_SK = 68                   # 4
A_DISC = 72                 # 1
A_GUESS = 73                # 1
A_UI = 74                   # 4
A_USED = A_UI + D_SKILL     # 78

# Output slab lane offsets (wrapper slices these).
O_ATT = C_ATT               # 64:68  att_all
O_CS = C_CS                 # 68:72  cognitive_state_b
O_P = 72                    # 72     p_correctness (any lane outside [O_ATT, O_CS+4))

# Weight-slab dtype: flip to jnp.bfloat16 on v5e/v6e to halve the W DMA
# (weights only feed the MXU); float32 keeps bit-close parity with the ref.
W_DTYPE = jnp.float32


def _leaky(x):
    return jnp.where(x > 0, x, NEG_SLOPE * x)


def _bn(x):
    # BatchNorm1d training-mode normalization over the batch (row) axis.
    # The two reductions are independent (var = E[x^2] - mean^2) so they
    # overlap instead of serializing mean -> (x-mean)^2 -> mean.
    inv_n = 1.0 / x.shape[0]
    mean = jnp.sum(x, axis=0, keepdims=True) * inv_n
    meansq = jnp.sum(x * x, axis=0, keepdims=True) * inv_n
    var = meansq - mean * mean
    return (x - mean) * jax.lax.rsqrt(var + EPS)


# ---------------------------------------------------------------------------
# Fused kernel: all 4 skills batched block-diagonally + IRT stage, no grid.
# ---------------------------------------------------------------------------
def _make_fused_kernel(emit_intermediates):
    def kernel(acts_ref, w_ref, v_ref, out_ref, *dbg_refs):
        S = D_SKILL
        acts = acts_ref[...]                               # (L, 128)
        L = acts.shape[0]
        x_t = acts[:, A_X:A_X + SD]                        # (L, 64) 4 skill copies
        x = acts[:, A_X:A_X + D_IN]                        # (L, 16)

        # iota-built constants (power-of-two bit ops; VPU has full slack here)
        lane64 = jax.lax.broadcasted_iota(jnp.int32, (L, SD), 1)
        pos = lane64 & (D_IN - 1)
        gf_mask = jnp.logical_and(pos >= D_UF, pos < D_UF + D_GF)
        lane = jax.lax.broadcasted_iota(jnp.int32, (L, SLAB_W), 1)
        r = jax.lax.broadcasted_iota(jnp.int32, (L, L), 0)
        c = jax.lax.broadcasted_iota(jnp.int32, (L, L), 1)
        causal = (c <= r).astype(jnp.float32)              # lower-triangular
        shift_m = (c + 1 == r).astype(jnp.float32)         # strict t-1 shift

        # --- encoders: BN (affine folded into W1/B1) + Linear/LeakyReLU/Linear
        xn = _bn(x)                                        # (L, 16)
        h = _leaky(jnp.dot(xn, w_ref[R_W1:R_WET, :].astype(jnp.float32),
                           preferred_element_type=jnp.float32)
                   + v_ref[V_EB1:V_EB1 + 1, :])            # (L, 128)
        att_res = (jnp.dot(h, w_ref[R_WET:R_TW1, :].astype(jnp.float32),
                           preferred_element_type=jnp.float32)
                   + v_ref[V_EB2:V_EB2 + 1, :])            # (L, 128)
        att_e = att_res[:, C_ATTE:C_ATTE + SD]             # (L, 64) skill-expanded att

        # --- encoded_game_feature = causal-weighted GF accumulation per skill
        weighted = jnp.where(gf_mask, att_e * x_t, 0.0)
        egf = jnp.dot(causal, weighted, preferred_element_type=jnp.float32)
        ti = jnp.where(gf_mask, egf, x_t)                  # stacked transformer_input

        # --- BatchNorm1d(affine=False) + transformer MLPs, batched ----------
        tin = _bn(ti)
        h1 = _leaky(jnp.dot(tin, w_ref[R_TW1:R_TW2, :].astype(jnp.float32),
                            preferred_element_type=jnp.float32)
                    + v_ref[V_TB1:V_TB1 + 1, :])
        h2 = (jnp.dot(h1, w_ref[R_TW2:R_TW3, :].astype(jnp.float32),
                      preferred_element_type=jnp.float32)
              + v_ref[V_TB2:V_TB2 + 1, :])
        h3 = _leaky(jnp.dot(h2, w_ref[R_TW3:R_END, :].astype(jnp.float32),
                            preferred_element_type=jnp.float32)
                    + v_ref[V_TB3:V_TB3 + 1, :])
        cs_res = (jnp.dot(h3, w_ref[R_WET:R_TW1, :].astype(jnp.float32),
                          preferred_element_type=jnp.float32)
                  + v_ref[V_EB2:V_EB2 + 1, :])             # cs_b at lanes C_CS:C_CS+4

        # --- IRT p_correctness (fused) ---------------------------------------
        cs_prev = jnp.dot(shift_m, cs_res,
                          preferred_element_type=jnp.float32)[:, C_CS:C_CS + S]
        cs_len = acts[:, A_UI:A_UI + S] + cs_prev          # (L, S)
        diff = acts[:, A_DIFF:A_DIFF + S]
        skill = acts[:, A_SK:A_SK + S]
        disc = acts[:, A_DISC:A_DISC + 1]
        guess = acts[:, A_GUESS:A_GUESS + 1]
        z = jnp.sum((cs_len - diff) * skill, axis=1, keepdims=True)        # (L, 1)
        denom = 1.0 + jnp.exp(-1.702 * disc * z)
        p = guess + (1.0 - guess) * pl.reciprocal(denom, approx=True)      # (L, 1)

        # --- single lane-dense output slab (one unmasked store) --------------
        att_lanes = jnp.logical_and(lane >= O_ATT, lane < O_ATT + S)
        cs_lanes = jnp.logical_and(lane >= O_CS, lane < O_CS + S)
        out_ref[...] = jnp.where(att_lanes, att_res,
                                 jnp.where(cs_lanes, cs_res, p))

        if emit_intermediates:                             # flag-gated debug outputs
            ti_ref, tin_ref = dbg_refs
            ti_ref[...] = ti
            tin_ref[...] = tin

    return kernel


# ---------------------------------------------------------------------------
# Parameter initialization (deterministic; mirrors the shapes in __init__).
# Linear weights are stored as (fan_in, fan_out) — torch's (out, in).T.
# ---------------------------------------------------------------------------
def init_params(key):
    ks = jax.random.split(key, 12)

    def lin(k, fan_in, shape):
        bound = 1.0 / np.sqrt(fan_in)
        return jax.random.uniform(k, shape, jnp.float32, -bound, bound)

    S = D_SKILL
    return {
        'enc_bn_gamma': jnp.ones((S, 1, D_IN), jnp.float32),
        'enc_bn_beta':  jnp.zeros((S, 1, D_IN), jnp.float32),
        'enc_w1': lin(ks[0], D_IN, (S, D_IN, ATT_HIDDEN)),
        'enc_b1': lin(ks[1], D_IN, (S, 1, ATT_HIDDEN)),
        'enc_w2': lin(ks[2], ATT_HIDDEN, (S, ATT_HIDDEN, 1)),
        'enc_b2': lin(ks[3], ATT_HIDDEN, (S, 1, 1)),
        'tr_w1': lin(ks[4], D_IN, (S, D_IN, STATE_HIDDEN)),
        'tr_b1': lin(ks[5], D_IN, (S, 1, STATE_HIDDEN)),
        'tr_w2': lin(ks[6], STATE_HIDDEN, (S, STATE_HIDDEN, STATE_HIDDEN)),
        'tr_b2': lin(ks[7], STATE_HIDDEN, (S, 1, STATE_HIDDEN)),
        'tr_w3': lin(ks[8], STATE_HIDDEN, (S, STATE_HIDDEN, STATE_HIDDEN)),
        'tr_b3': lin(ks[9], STATE_HIDDEN, (S, 1, STATE_HIDDEN)),
        'tr_w4': lin(ks[10], STATE_HIDDEN, (S, STATE_HIDDEN, 1)),
        'tr_b4': lin(ks[11], STATE_HIDDEN, (S, 1, 1)),
        # registered nn.Parameters, exactly as in __init__:
        'user_init': jnp.zeros((N_USERS, D_SKILL), jnp.float32),
        'CD_diff':   jnp.zeros((N_GAMES, D_SKILL), jnp.float32),
        'CD_disc':   jnp.ones((N_GAMES, 1), jnp.float32) * 0.2,
        'CD_guess':  jnp.zeros((N_GAMES, 1), jnp.float32),
    }


# ---------------------------------------------------------------------------
# One-time host-side packing: compacted block-diagonal weight slab W (464,128)
# with the BN affine folded into layer 1, enc_w2 augmented to emit the
# skill-expanded attention directly, and enc_w2/tr_w4 co-packed; plus the
# bias/affine vector slab V (8,128).
# ---------------------------------------------------------------------------
def pack_params(params):
    S, DI, AH = D_SKILL, D_IN, ATT_HIDDEN
    p = {k: np.asarray(v, np.float32) for k, v in params.items()}

    def block_diag(ws):                 # (S, din, dout) -> (S*din, S*dout)
        _, di, do = ws.shape
        out = np.zeros((S * di, S * do), np.float32)
        for i in range(S):
            out[i * di:(i + 1) * di, i * do:(i + 1) * do] = ws[i]
        return out

    def pad_lanes(a):
        return np.pad(a, ((0, 0), (0, SLAB_W - a.shape[1])))

    # Rows 0:16 — dense encoder layer-1 with the BN affine folded in:
    #   (xn*gamma + beta) @ w1 + b1 == xn @ (gamma[:,None]*w1) + (beta @ w1 + b1)
    W1 = np.zeros((DI, SLAB_W), np.float32)
    B1 = np.zeros((1, SLAB_W), np.float32)
    for s in range(S):
        g, b = p['enc_bn_gamma'][s, 0], p['enc_bn_beta'][s, 0]
        w1, b1 = p['enc_w1'][s], p['enc_b1'][s, 0]
        W1[:, s * AH:(s + 1) * AH] = g[:, None] * w1
        B1[0, s * AH:(s + 1) * AH] = b @ w1 + b1

    # Rows 16:144 — co-packed enc_w2 (compact + skill-expanded) and tr_w4.
    WET = np.zeros((S * AH, SLAB_W), np.float32)
    BET = np.zeros((1, SLAB_W), np.float32)
    for s in range(S):
        rows = slice(s * AH, (s + 1) * AH)
        w2, b2 = p['enc_w2'][s][:, 0], p['enc_b2'][s, 0, 0]
        w4, b4 = p['tr_w4'][s][:, 0], p['tr_b4'][s, 0, 0]
        WET[rows, C_ATTE + s * DI:C_ATTE + (s + 1) * DI] = w2[:, None]
        WET[rows, C_ATT + s] = w2
        WET[rows, C_CS + s] = w4
        BET[0, C_ATTE + s * DI:C_ATTE + (s + 1) * DI] = b2
        BET[0, C_ATT + s] = b2
        BET[0, C_CS + s] = b4

    W = np.concatenate([
        W1,
        WET,
        pad_lanes(block_diag(p['tr_w1'])),      # rows R_TW1:R_TW2
        pad_lanes(block_diag(p['tr_w2'])),      # rows R_TW2:R_TW3
        pad_lanes(block_diag(p['tr_w3'])),      # rows R_TW3:R_END
    ], axis=0)
    assert W.shape == (R_END, SLAB_W)

    def vec_row(v):                     # (S, 1, d) -> (1, SLAB_W), skill-major
        flat = v.reshape(1, -1)
        return np.pad(flat, ((0, 0), (0, SLAB_W - flat.shape[1])))

    V = np.concatenate([
        B1, BET,
        vec_row(p['tr_b1']), vec_row(p['tr_b2']), vec_row(p['tr_b3']),
        np.zeros((3, SLAB_W), np.float32),
    ], axis=0)
    assert V.shape == (8, SLAB_W)

    return {'W': jnp.asarray(W, dtype=W_DTYPE), 'V': jnp.asarray(V),
            'user_init': params['user_init'], 'CD_diff': params['CD_diff'],
            'CD_disc': params['CD_disc'], 'CD_guess': params['CD_guess']}


# ---------------------------------------------------------------------------
# Forward wrapper (gathers + one merged activation slab; ONE pallas_call).
# ---------------------------------------------------------------------------
@functools.partial(jax.jit, static_argnames=("emit_intermediates",))
def transformer_model_forward(packed, UF, GF, GS, user, questions, context,
                              emit_intermediates=False):
    L = questions.shape[0]
    S = D_SKILL

    Game_skill = GS[questions]                         # (L, S)
    Game_feature = GF[questions]                       # (L, D_GF)
    Game_diff = packed['CD_diff'][questions]           # (L, S)
    Game_disc = packed['CD_disc'][questions]           # (L, 1)
    CD_guess = packed['CD_guess'][questions]           # (L, 1)
    User_feature = jnp.broadcast_to(UF[user][None, :], (L, D_UF))
    User_init = jnp.broadcast_to(packed['user_init'][user][None, :], (L, S))

    encoder_inputs = jnp.concatenate([User_feature, Game_feature, context], axis=1)

    # Merged (L,128) activation slab: 4 lane-copies of encoder_inputs + IRT rows.
    acts = jnp.concatenate(
        [encoder_inputs] * S
        + [Game_diff, Game_skill, Game_disc, CD_guess, User_init,
           jnp.zeros((L, SLAB_W - A_USED), jnp.float32)],
        axis=1)

    out_shapes = [jax.ShapeDtypeStruct((L, SLAB_W), jnp.float32)]   # packed output slab
    if emit_intermediates:
        out_shapes += [jax.ShapeDtypeStruct((L, SD), jnp.float32)] * 2

    outs = pl.pallas_call(
        _make_fused_kernel(emit_intermediates),
        out_shape=tuple(out_shapes),
        cost_estimate=pl.CostEstimate(flops=1_250_000, transcendentals=32,
                                      bytes_accessed=260_000),
    )(acts, packed['W'], packed['V'])

    slab = outs[0]
    att_all = slab[:, O_ATT:O_ATT + S]
    cs_b = slab[:, O_CS:O_CS + S]
    p_correctness = slab[:, O_P:O_P + 1]

    result = {
        'encoder_inputs': encoder_inputs,
        'att_all': att_all,
        'att_all_list': [att_all[:, i:i + 1] for i in range(S)],
        'cognitive_state_b': cs_b,
        'cognitive_states': [cs_b[:, i:i + 1] for i in range(S)],
        'p_correctness': p_correctness,
        'transformer_inputs': None,      # debug tensors; only emitted when requested
        'transformer_inputs_n': None,
    }
    if emit_intermediates:
        ti_s, tin_s = outs[1], outs[2]
        result['transformer_inputs'] = [ti_s[:, i * D_IN:(i + 1) * D_IN] for i in range(S)]
        result['transformer_inputs_n'] = [tin_s[:, i * D_IN:(i + 1) * D_IN] for i in range(S)]
    return result


# ---------------------------------------------------------------------------
# Pure-JAX reference (mirrors the torch code line by line) for validation.
# ---------------------------------------------------------------------------
def reference_forward(params, UF, GF, GS, user, questions, context):
    def bn_ref(x):
        mean = jnp.mean(x, axis=0, keepdims=True)
        var = jnp.mean((x - mean) ** 2, axis=0, keepdims=True)
        return (x - mean) * jax.lax.rsqrt(var + EPS)

    L = questions.shape[0]
    Game_skill = GS[questions]
    Game_feature = GF[questions]
    Game_diff = params['CD_diff'][questions]
    Game_disc = params['CD_disc'][questions]
    CD_guess = params['CD_guess'][questions]
    User_feature = jnp.broadcast_to(UF[user][None, :], (L, D_UF))
    User_init = params['user_init'][user]
    enc_in = jnp.concatenate([User_feature, Game_feature, context], 1)

    att_list, cs_list = [], []
    for s in range(D_SKILL):
        xn = bn_ref(enc_in) * params['enc_bn_gamma'][s, 0] + params['enc_bn_beta'][s, 0]
        h = _leaky(xn @ params['enc_w1'][s] + params['enc_b1'][s, 0])
        att = h @ params['enc_w2'][s] + params['enc_b2'][s, 0]
        att_matrix = jnp.triu(jnp.tile(att, (1, L)))
        egf = (Game_feature.T @ att_matrix).T
        ti = jnp.concatenate([User_feature, egf, context], 1)
        tin = bn_ref(ti)
        h1 = _leaky(tin @ params['tr_w1'][s] + params['tr_b1'][s, 0])
        h2 = h1 @ params['tr_w2'][s] + params['tr_b2'][s, 0]
        h3 = _leaky(h2 @ params['tr_w3'][s] + params['tr_b3'][s, 0])
        cs = h3 @ params['tr_w4'][s] + params['tr_b4'][s, 0]
        att_list.append(att)
        cs_list.append(cs)

    cs_b = jnp.concatenate(cs_list, 1)
    att_all = jnp.concatenate(att_list, 1)
    cstate = jnp.concatenate([User_init[None, :], cs_b + User_init], 0)
    cs_len = cstate[:-1]
    z = ((cs_len - Game_diff) * Game_skill).sum(1, keepdims=True)
    p = CD_guess + (1 - CD_guess) / (1 + jnp.exp(-1.702 * Game_disc * z))
    return att_all, cs_b, p


if __name__ == "__main__":
    key = jax.random.PRNGKey(0)
    k_uf, k_gf, k_gs, k_ctx, k_q, k_par = jax.random.split(key, 6)

    UF = jax.random.normal(k_uf, (N_USERS, D_UF), jnp.float32)
    GF = jax.random.normal(k_gf, (N_GAMES, D_GF), jnp.float32)
    GS = jax.random.bernoulli(k_gs, 0.5, (N_GAMES, D_SKILL)).astype(jnp.float32)
    Context = jax.random.normal(k_ctx, (SEQ_LEN, D_CF), jnp.float32)
    questions = jax.random.randint(k_q, (SEQ_LEN,), 0, N_GAMES)
    user = 2

    params = init_params(k_par)
    packed = pack_params(params)           # one-time host-side packing

    out = transformer_model_forward(packed, UF, GF, GS, user, questions, Context)
    jax.block_until_ready(out['p_correctness'])

    # sanity check against the pure-JAX reference
    att_ref_, cs_ref_, p_ref_ = reference_forward(params, UF, GF, GS, user, questions, Context)
    np.testing.assert_allclose(np.asarray(out['att_all']), np.asarray(att_ref_),
                               rtol=1e-2, atol=1e-3)
    np.testing.assert_allclose(np.asarray(out['cognitive_state_b']), np.asarray(cs_ref_),
                               rtol=1e-2, atol=1e-3)
    np.testing.assert_allclose(np.asarray(out['p_correctness']), np.asarray(p_ref_),
                               rtol=1e-2, atol=1e-3)

    print("KERNEL_OK")
</pallas_src>

<mosaic_0001>
module attributes {stable_mosaic.version = 11 : i64} {
  func.func @kernel(%arg0: memref<8x128xf32, #tpu.memory_space<vmem>>, %arg1: memref<464x128xf32, #tpu.memory_space<vmem>>, %arg2: memref<8x128xf32, #tpu.memory_space<vmem>>, %arg3: memref<8x128xf32, #tpu.memory_space<vmem>>) attributes {dimension_semantics = [], scalar_prefetch = 0 : i64, scratch_operands = 0 : i64, tpu.core_type = #tpu.core_type<tc>} {
    %c0 = arith.constant 0 : index
    %c0_0 = arith.constant 0 : index
    %0 = vector.load %arg0[%c0, %c0_0] : memref<8x128xf32, #tpu.memory_space<vmem>>, vector<8x128xf32>
    %1 = vector.extract_strided_slice %0 {offsets = [0, 0], sizes = [8, 64], strides = [1, 1]} : vector<8x128xf32> to vector<8x64xf32>
    %2 = vector.extract_strided_slice %0 {offsets = [0, 0], sizes = [8, 16], strides = [1, 1]} : vector<8x128xf32> to vector<8x16xf32>
    %3 = tpu.iota {dimensions = array<i32: 1>} : vector<8x64xi32>
    %c15_i32 = arith.constant 15 : i32
    %4 = vector.broadcast %c15_i32 : i32 to vector<8x64xi32>
    %5 = arith.andi %3, %4 : vector<8x64xi32>
    %c6_i32 = arith.constant 6 : i32
    %6 = vector.broadcast %c6_i32 : i32 to vector<8x64xi32>
    %7 = arith.cmpi sge, %5, %6 : vector<8x64xi32>
    %c11_i32 = arith.constant 11 : i32
    %8 = vector.broadcast %c11_i32 : i32 to vector<8x64xi32>
    %9 = arith.cmpi slt, %5, %8 : vector<8x64xi32>
    %10 = arith.andi %7, %9 : vector<8x64xi1>
    %11 = tpu.iota {dimensions = array<i32: 1>} : vector<8x128xi32>
    %12 = tpu.iota {dimensions = array<i32: 0>} : vector<8x8xi32>
    %13 = tpu.iota {dimensions = array<i32: 1>} : vector<8x8xi32>
    %14 = arith.cmpi sle, %13, %12 : vector<8x8xi32>
    %15 = arith.extui %14 : vector<8x8xi1> to vector<8x8xi32>
    %16 = arith.sitofp %15 : vector<8x8xi32> to vector<8x8xf32>
    %c1_i32 = arith.constant 1 : i32
    %17 = vector.broadcast %c1_i32 : i32 to vector<8x8xi32>
    %18 = arith.addi %13, %17 : vector<8x8xi32>
    %19 = arith.cmpi eq, %18, %12 : vector<8x8xi32>
    %20 = arith.extui %19 : vector<8x8xi1> to vector<8x8xi32>
    %21 = arith.sitofp %20 : vector<8x8xi32> to vector<8x8xf32>
    %cst = arith.constant dense<0.000000e+00> : vector<16xf32>
    %22 = vector.multi_reduction <add>, %2, %cst [0] : vector<8x16xf32> to vector<16xf32>
    %23 = vector.shape_cast %22 : vector<16xf32> to vector<1x16xf32>
    %cst_1 = arith.constant 1.250000e-01 : f32
    %24 = vector.broadcast %cst_1 : f32 to vector<1x16xf32>
    %25 = arith.mulf %23, %24 : vector<1x16xf32>
    %26 = arith.mulf %2, %2 : vector<8x16xf32>
    %cst_2 = arith.constant dense<0.000000e+00> : vector<16xf32>
    %27 = vector.multi_reduction <add>, %26, %cst_2 [0] : vector<8x16xf32> to vector<16xf32>
    %28 = vector.shape_cast %27 : vector<16xf32> to vector<1x16xf32>
    %cst_3 = arith.constant 1.250000e-01 : f32
    %29 = vector.broadcast %cst_3 : f32 to vector<1x16xf32>
    %30 = arith.mulf %28, %29 : vector<1x16xf32>
    %31 = arith.mulf %25, %25 : vector<1x16xf32>
    %32 = arith.subf %30, %31 : vector<1x16xf32>
    %33 = vector.broadcast %25 : vector<1x16xf32> to vector<8x16xf32>
    %34 = arith.subf %2, %33 : vector<8x16xf32>
    %cst_4 = arith.constant 9.99999974E-6 : f32
    %35 = vector.broadcast %cst_4 : f32 to vector<1x16xf32>
    %36 = arith.addf %32, %35 : vector<1x16xf32>
    %37 = math.rsqrt %36 : vector<1x16xf32>
    %38 = vector.broadcast %37 : vector<1x16xf32> to vector<8x16xf32>
    %39 = arith.mulf %34, %38 : vector<8x16xf32>
    %c0_5 = arith.constant 0 : index
    %c0_6 = arith.constant 0 : index
    %40 = vector.load %arg1[%c0_5, %c0_6] : memref<464x128xf32, #tpu.memory_space<vmem>>, vector<16x128xf32>
    %cst_7 = arith.constant dense<0.000000e+00> : vector<8x128xf32>
    %41 = tpu.matmul %39, %40, %cst_7 {dimension_numbers = #tpu.dot_dimension_numbers<[1], [0], [0], [1], [0, 0, 1, 1], [], []>} : vector<8x16xf32>, vector<16x128xf32>, vector<8x128xf32> -> vector<8x128xf32>
    %c0_8 = arith.constant 0 : index
    %c0_9 = arith.constant 0 : index
    %42 = vector.load %arg2[%c0_8, %c0_9] : memref<8x128xf32, #tpu.memory_space<vmem>>, vector<1x128xf32>
    %43 = vector.broadcast %42 : vector<1x128xf32> to vector<8x128xf32>
    %44 = arith.addf %41, %43 : vector<8x128xf32>
    %cst_10 = arith.constant 0.000000e+00 : f32
    %45 = vector.broadcast %cst_10 : f32 to vector<8x128xf32>
    %46 = arith.cmpf ogt, %44, %45 : vector<8x128xf32>
    %cst_11 = arith.constant 0.00999999977 : f32
    %47 = vector.broadcast %cst_11 : f32 to vector<8x128xf32>
    %48 = arith.mulf %47, %44 : vector<8x128xf32>
    %49 = arith.select %46, %44, %48 : vector<8x128xi1>, vector<8x128xf32>
    %c16 = arith.constant 16 : index
    %c0_12 = arith.constant 0 : index
    %50 = vector.load %arg1[%c16, %c0_12] : memref<464x128xf32, #tpu.memory_space<vmem>>, vector<128x128xf32>
    %cst_13 = arith.constant dense<0.000000e+00> : vector<8x128xf32>
    %51 = tpu.matmul %49, %50, %cst_13 {dimension_numbers = #tpu.dot_dimension_numbers<[1], [0], [0], [1], [0, 0, 1, 1], [], []>} : vector<8x128xf32>, vector<128x128xf32>, vector<8x128xf32> -> vector<8x128xf32>
    %c1 = arith.constant 1 : index
    %c0_14 = arith.constant 0 : index
    %52 = vector.load %arg2[%c1, %c0_14] : memref<8x128xf32, #tpu.memory_space<vmem>>, vector<1x128xf32>
    %53 = vector.broadcast %52 : vector<1x128xf32> to vector<8x128xf32>
    %54 = arith.addf %51, %53 : vector<8x128xf32>
    %55 = vector.extract_strided_slice %54 {offsets = [0, 0], sizes = [8, 64], strides = [1, 1]} : vector<8x128xf32> to vector<8x64xf32>
    %56 = arith.mulf %55, %1 : vector<8x64xf32>
    %cst_15 = arith.constant 0.000000e+00 : f32
    %57 = vector.broadcast %cst_15 : f32 to vector<8x64xf32>
    %58 = arith.select %10, %56, %57 : vector<8x64xi1>, vector<8x64xf32>
    %cst_16 = arith.constant dense<0.000000e+00> : vector<8x64xf32>
    %59 = tpu.matmul %16, %58, %cst_16 {dimension_numbers = #tpu.dot_dimension_numbers<[1], [0], [0], [1], [0, 0, 1, 1], [], []>} : vector<8x8xf32>, vector<8x64xf32>, vector<8x64xf32> -> vector<8x64xf32>
    %60 = arith.select %10, %59, %1 : vector<8x64xi1>, vector<8x64xf32>
    %cst_17 = arith.constant dense<0.000000e+00> : vector<64xf32>
    %61 = vector.multi_reduction <add>, %60, %cst_17 [0] : vector<8x64xf32> to vector<64xf32>
    %62 = vector.shape_cast %61 : vector<64xf32> to vector<1x64xf32>
    %cst_18 = arith.constant 1.250000e-01 : f32
    %63 = vector.broadcast %cst_18 : f32 to vector<1x64xf32>
    %64 = arith.mulf %62, %63 : vector<1x64xf32>
    %65 = arith.mulf %60, %60 : vector<8x64xf32>
    %cst_19 = arith.constant dense<0.000000e+00> : vector<64xf32>
    %66 = vector.multi_reduction <add>, %65, %cst_19 [0] : vector<8x64xf32> to vector<64xf32>
    %67 = vector.shape_cast %66 : vector<64xf32> to vector<1x64xf32>
    %cst_20 = arith.constant 1.250000e-01 : f32
    %68 = vector.broadcast %cst_20 : f32 to vector<1x64xf32>
    %69 = arith.mulf %67, %68 : vector<1x64xf32>
    %70 = arith.mulf %64, %64 : vector<1x64xf32>
    %71 = arith.subf %69, %70 : vector<1x64xf32>
    %72 = vector.broadcast %64 : vector<1x64xf32> to vector<8x64xf32>
    %73 = arith.subf %60, %72 : vector<8x64xf32>
    %cst_21 = arith.constant 9.99999974E-6 : f32
    %74 = vector.broadcast %cst_21 : f32 to vector<1x64xf32>
    %75 = arith.addf %71, %74 : vector<1x64xf32>
    %76 = math.rsqrt %75 : vector<1x64xf32>
    %77 = vector.broadcast %76 : vector<1x64xf32> to vector<8x64xf32>
    %78 = arith.mulf %73, %77 : vector<8x64xf32>
    %c144 = arith.constant 144 : index
    %c0_22 = arith.constant 0 : index
    %79 = vector.load %arg1[%c144, %c0_22] : memref<464x128xf32, #tpu.memory_space<vmem>>, vector<64x128xf32>
    %cst_23 = arith.constant dense<0.000000e+00> : vector<8x128xf32>
    %80 = tpu.matmul %78, %79, %cst_23 {dimension_numbers = #tpu.dot_dimension_numbers<[1], [0], [0], [1], [0, 0, 1, 1], [], []>} : vector<8x64xf32>, vector<64x128xf32>, vector<8x128xf32> -> vector<8x128xf32>
    %c2 = arith.constant 2 : index
    %c0_24 = arith.constant 0 : index
    %81 = vector.load %arg2[%c2, %c0_24] : memref<8x128xf32, #tpu.memory_space<vmem>>, vector<1x128xf32>
    %82 = vector.broadcast %81 : vector<1x128xf32> to vector<8x128xf32>
    %83 = arith.addf %80, %82 : vector<8x128xf32>
    %cst_25 = arith.constant 0.000000e+00 : f32
    %84 = vector.broadcast %cst_25 : f32 to vector<8x128xf32>
    %85 = arith.cmpf ogt, %83, %84 : vector<8x128xf32>
    %cst_26 = arith.constant 0.00999999977 : f32
    %86 = vector.broadcast %cst_26 : f32 to vector<8x128xf32>
    %87 = arith.mulf %86, %83 : vector<8x128xf32>
    %88 = arith.select %85, %83, %87 : vector<8x128xi1>, vector<8x128xf32>
    %c208 = arith.constant 208 : index
    %c0_27 = arith.constant 0 : index
    %89 = vector.load %arg1[%c208, %c0_27] : memref<464x128xf32, #tpu.memory_space<vmem>>, vector<128x128xf32>
    %cst_28 = arith.constant dense<0.000000e+00> : vector<8x128xf32>
    %90 = tpu.matmul %88, %89, %cst_28 {dimension_numbers = #tpu.dot_dimension_numbers<[1], [0], [0], [1], [0, 0, 1, 1], [], []>} : vector<8x128xf32>, vector<128x128xf32>, vector<8x128xf32> -> vector<8x128xf32>
    %c3 = arith.constant 3 : index
    %c0_29 = arith.constant 0 : index
    %91 = vector.load %arg2[%c3, %c0_29] : memref<8x128xf32, #tpu.memory_space<vmem>>, vector<1x128xf32>
    %92 = vector.broadcast %91 : vector<1x128xf32> to vector<8x128xf32>
    %93 = arith.addf %90, %92 : vector<8x128xf32>
    %c336 = arith.constant 336 : index
    %c0_30 = arith.constant 0 : index
    %94 = vector.load %arg1[%c336, %c0_30] : memref<464x128xf32, #tpu.memory_space<vmem>>, vector<128x128xf32>
    %cst_31 = arith.constant dense<0.000000e+00> : vector<8x128xf32>
    %95 = tpu.matmul %93, %94, %cst_31 {dimension_numbers = #tpu.dot_dimension_numbers<[1], [0], [0], [1], [0, 0, 1, 1], [], []>} : vector<8x128xf32>, vector<128x128xf32>, vector<8x128xf32> -> vector<8x128xf32>
    %c4 = arith.constant 4 : index
    %c0_32 = arith.constant 0 : index
    %96 = vector.load %arg2[%c4, %c0_32] : memref<8x128xf32, #tpu.memory_space<vmem>>, vector<1x128xf32>
    %97 = vector.broadcast %96 : vector<1x128xf32> to vector<8x128xf32>
    %98 = arith.addf %95, %97 : vector<8x128xf32>
    %cst_33 = arith.constant 0.000000e+00 : f32
    %99 = vector.broadcast %cst_33 : f32 to vector<8x128xf32>
    %100 = arith.cmpf ogt, %98, %99 : vector<8x128xf32>
    %cst_34 = arith.constant 0.00999999977 : f32
    %101 = vector.broadcast %cst_34 : f32 to vector<8x128xf32>
    %102 = arith.mulf %101, %98 : vector<8x128xf32>
    %103 = arith.select %100, %98, %102 : vector<8x128xi1>, vector<8x128xf32>
    %c16_35 = arith.constant 16 : index
    %c0_36 = arith.constant 0 : index
    %104 = vector.load %arg1[%c16_35, %c0_36] : memref<464x128xf32, #tpu.memory_space<vmem>>, vector<128x128xf32>
    %cst_37 = arith.constant dense<0.000000e+00> : vector<8x128xf32>
    %105 = tpu.matmul %103, %104, %cst_37 {dimension_numbers = #tpu.dot_dimension_numbers<[1], [0], [0], [1], [0, 0, 1, 1], [], []>} : vector<8x128xf32>, vector<128x128xf32>, vector<8x128xf32> -> vector<8x128xf32>
    %c1_38 = arith.constant 1 : index
    %c0_39 = arith.constant 0 : index
    %106 = vector.load %arg2[%c1_38, %c0_39] : memref<8x128xf32, #tpu.memory_space<vmem>>, vector<1x128xf32>
    %107 = vector.broadcast %106 : vector<1x128xf32> to vector<8x128xf32>
    %108 = arith.addf %105, %107 : vector<8x128xf32>
    %cst_40 = arith.constant dense<0.000000e+00> : vector<8x128xf32>
    %109 = tpu.matmul %21, %108, %cst_40 {dimension_numbers = #tpu.dot_dimension_numbers<[1], [0], [0], [1], [0, 0, 1, 1], [], []>} : vector<8x8xf32>, vector<8x128xf32>, vector<8x128xf32> -> vector<8x128xf32>
    %110 = vector.extract_strided_slice %109 {offsets = [0, 68], sizes = [8, 4], strides = [1, 1]} : vector<8x128xf32> to vector<8x4xf32>
    %111 = vector.extract_strided_slice %0 {offsets = [0, 74], sizes = [8, 4], strides = [1, 1]} : vector<8x128xf32> to vector<8x4xf32>
    %112 = arith.addf %111, %110 : vector<8x4xf32>
    %113 = vector.extract_strided_slice %0 {offsets = [0, 64], sizes = [8, 4], strides = [1, 1]} : vector<8x128xf32> to vector<8x4xf32>
    %114 = vector.extract_strided_slice %0 {offsets = [0, 68], sizes = [8, 4], strides = [1, 1]} : vector<8x128xf32> to vector<8x4xf32>
    %115 = vector.extract_strided_slice %0 {offsets = [0, 72], sizes = [8, 1], strides = [1, 1]} : vector<8x128xf32> to vector<8x1xf32>
    %116 = vector.extract_strided_slice %0 {offsets = [0, 73], sizes = [8, 1], strides = [1, 1]} : vector<8x128xf32> to vector<8x1xf32>
    %117 = arith.subf %112, %113 : vector<8x4xf32>
    %118 = arith.mulf %117, %114 : vector<8x4xf32>
    %cst_41 = arith.constant dense<0.000000e+00> : vector<8xf32>
    %119 = vector.multi_reduction <add>, %118, %cst_41 [1] : vector<8x4xf32> to vector<8xf32>
    %120 = vector.shape_cast %119 : vector<8xf32> to vector<8x1xf32>
    %cst_42 = arith.constant -1.702000e+00 : f32
    %121 = vector.broadcast %cst_42 : f32 to vector<8x1xf32>
    %122 = arith.mulf %121, %115 : vector<8x1xf32>
    %123 = arith.mulf %122, %120 : vector<8x1xf32>
    %124 = math.exp %123 : vector<8x1xf32>
    %cst_43 = arith.constant 1.000000e+00 : f32
    %125 = vector.broadcast %cst_43 : f32 to vector<8x1xf32>
    %126 = arith.addf %125, %124 : vector<8x1xf32>
    %cst_44 = arith.constant 1.000000e+00 : f32
    %127 = vector.broadcast %cst_44 : f32 to vector<8x1xf32>
    %128 = arith.subf %127, %116 : vector<8x1xf32>
    %129 = tpu.reciprocal %126 {approx = true} : vector<8x1xf32> -> vector<8x1xf32>
    %130 = arith.mulf %128, %129 : vector<8x1xf32>
    %131 = arith.addf %116, %130 : vector<8x1xf32>
    %c64_i32 = arith.constant 64 : i32
    %132 = vector.broadcast %c64_i32 : i32 to vector<8x128xi32>
    %133 = arith.cmpi sge, %11, %132 : vector<8x128xi32>
    %c68_i32 = arith.constant 68 : i32
    %134 = vector.broadcast %c68_i32 : i32 to vector<8x128xi32>
    %135 = arith.cmpi slt, %11, %134 : vector<8x128xi32>
    %136 = arith.andi %133, %135 : vector<8x128xi1>
    %c68_i32_45 = arith.constant 68 : i32
    %137 = vector.broadcast %c68_i32_45 : i32 to vector<8x128xi32>
    %138 = arith.cmpi sge, %11, %137 : vector<8x128xi32>
    %c72_i32 = arith.constant 72 : i32
    %139 = vector.broadcast %c72_i32 : i32 to vector<8x128xi32>
    %140 = arith.cmpi slt, %11, %139 : vector<8x128xi32>
    %141 = arith.andi %138, %140 : vector<8x128xi1>
    %142 = vector.shape_cast %131 : vector<8x1xf32> to vector<8x1xf32>
    %143 = vector.broadcast %142 : vector<8x1xf32> to vector<8x128xf32>
    %144 = arith.select %141, %108, %143 : vector<8x128xi1>, vector<8x128xf32>
    %145 = arith.select %136, %54, %144 : vector<8x128xi1>, vector<8x128xf32>
    %c0_46 = arith.constant 0 : index
    %c0_47 = arith.constant 0 : index
    %146 = vector.load %arg3[%c0_46, %c0_47] : memref<8x128xf32, #tpu.memory_space<vmem>>, vector<8x128xf32>
    tpu.vector_store %arg3[%c0_46, %c0_47], %145 {strides = array<i32>} : memref<8x128xf32, #tpu.memory_space<vmem>>, vector<8x128xf32>,
    return
  }
}

</mosaic_0001>

<llo_original>
// kernel: transformer_model_forward.1
$region0: #{transformer_model_forward.1}
  #allocation0 [shape = 'u32[]', space=smem, size = 0x4, offset = 0x4, fixed_abs, tag = 'smem constant byte address 0x4 - core index']
  #allocation1 [shape = 'u32[144,128]{1,0:T(1,128)}', space=vmem, size = 0x12000, scoped, tag = 'internal scratch']
  %s0 = inlined_call_operand.vmem [shape: f32[8,128], index: 0, kind: input, shape index: {}]
  %s1 = inlined_call_operand.vmem [shape: f32[464,128], index: 1, kind: input, shape index: {}]
  %s2 = inlined_call_operand.vmem [shape: f32[8,128], index: 2, kind: input, shape index: {}]
  %s3 = inlined_call_operand.vmem [shape: f32[8,128], index: 3, kind: output, shape index: {}]
  %s4 = sld [smem:[#allocation0]]
  $region22: #{transformer_model_forward.1} parent=0
    _
  %s6 = ssub.s32 1, %s4
  %s7 = scalar_select 0, %s6, %s4
  // Predicated region
  $region2: #{transformer_model_forward.1} parent=0 // pred_check
    _
  $region3: #{transformer_model_forward.1} parent=0 // pred_check_branch
    %9 = sbr.rel (0) target = $region5
  $region4: #{transformer_model_forward.1} parent=0 // pred_region
    _
  $region5: #{transformer_model_forward.1} parent=0 // pred_fallthru
    _
  // Predicated region
  $region6: #{transformer_model_forward.1} parent=0 // pred_check
    _
  $region7: #{transformer_model_forward.1} parent=0 // pred_check_branch
    %11 = sbr.rel (0) target = $region9
  $region8: #{transformer_model_forward.1} parent=0 // pred_region
    _
  $region9: #{transformer_model_forward.1} parent=0 // pred_fallthru
    _
  // Predicated region
  $region10: #{transformer_model_forward.1} parent=0 // pred_check
    _
  $region11: #{transformer_model_forward.1} parent=0 // pred_check_branch
    %13 = sbr.rel (0) target = $region13
  $region12: #{transformer_model_forward.1} parent=0 // pred_region
    _
  $region13: #{transformer_model_forward.1} parent=0 // pred_fallthru
    _
  %v14 = vld [vmem:[%s0] sm:$0xff]
  %v15 = vlaneseq
  %v16 = vand.u32 %v15, 127
  %v17 = vand.u32 %v16, 15
  %vm18 = vcmp.ge.s32.totalorder %v17, 6
  %vm19 = vcmp.lt.s32.totalorder %v17, 11
  %vm20 = vmand %vm18, %vm19
  %v21 = vlaneseq
  %v22 = vshrl.u32 %v21, 7
  %vm23 = vcmp.le.s32.totalorder %v16, %v22
  %v24 = vsel %vm23, 1, 0
  %v25 = vcvt.s32.f32 %v24
  %v26 = vadd.s32 %v16, 1
  %vm27 = vcmp.eq.s32.totalorder %v26, %v22
  %v28 = vsel %vm27, 1, 0
  %v29 = vcvt.s32.f32 %v28
  %vm30 = vcmask 130048
  %v31 = vsel %vm30, %v14, 0.0
  %v32 = vrot.slane %v31, 4
  %v33 = vadd.f32 %v31, %v32
  %v34 = vrot.slane %v33, 2
  %v35 = vadd.f32 %v33, %v34
  %v36 = vrot.slane %v35, 1
  %v37 = vadd.f32 %v35, %v36
  %v38 = vmul.f32 %v37, 0.125
  %v39 = vmul.f32 %v14, %v14
  %v40 = vsel %vm30, %v39, 0.0
  %v41 = vrot.slane %v40, 4
  %v42 = vadd.f32 %v40, %v41
  %v43 = vrot.slane %v42, 2
  %v44 = vadd.f32 %v42, %v43
  %v45 = vrot.slane %v44, 1
  %v46 = vadd.f32 %v44, %v45
  %v47 = vmul.f32 %v46, 0.125
  %v48 = vmul.f32 %v38, %v38
  %v49 = vsub.f32 %v47, %v48
  %v50 = vsub.f32 %v14, %v38
  %v51 = vadd.f32 %v49, 1e-05
  %v52 = vrsqrt.pop %v51
  %v53 = vmul.f32 %v50, %v52
  %v54 = vld [vmem:[%s1] sm:$0xff]
  %v55 = vld [vmem:[%s1 + $0x8] sm:$0xff]
  %v56 = vld [vmem:[%s2] sm:$0x1]
  %v57 = vlaneseq
  %v58 = vshrl.u32 %v57, 7
  %v59 = vsub.s32 0, %v58
  %v60 = vrot.slane %v56, %v59
  %v62 = vsel %vm30, %v53, 0
  %64 = vmatprep.subr.mxu0 0.0
  %65 = vmatpush1.msra.mxu0 %v54
  %66 = vmatprep.subr.mxu0 0.0
  %67 = vmatpush1.msra.mxu0 %v55
  %68 = vmatprep.subr.mxu0 0.0
  %69 = vmatpush1.msra.mxu0 0.0
  %70 = vmatprep.subr.mxu0 0.0
  %71 = vmatpush1.msra.mxu0 0.0
  %72 = vmatprep.subr.mxu0 0.0
  %73 = vmatpush1.msra.mxu0 0.0
  %74 = vmatprep.subr.mxu0 0.0
  %75 = vmatpush1.msra.mxu0 0.0
  %76 = vmatprep.subr.mxu0 0.0
  %77 = vmatpush1.msra.mxu0 0.0
  %78 = vmatprep.subr.mxu0 0.0
  %79 = vmatpush1.msra.mxu0 0.0
  %80 = vmatprep.subr.mxu0 0.0
  %81 = vmatpush1.msra.mxu0 0.0
  %82 = vmatprep.subr.mxu0 0.0
  %83 = vmatpush1.msra.mxu0 0.0
  %84 = vmatprep.subr.mxu0 0.0
  %85 = vmatpush1.msra.mxu0 0.0
  %86 = vmatprep.subr.mxu0 0.0
  %87 = vmatpush1.msra.mxu0 0.0
  %88 = vmatprep.subr.mxu0 0.0
  %89 = vmatpush1.msra.mxu0 0.0
  %90 = vmatprep.subr.mxu0 0.0
  %91 = vmatpush1.msra.mxu0 0.0
  %92 = vmatprep.subr.mxu0 0.0
  %93 = vmatpush1.msra.mxu0 0.0
  %94 = vmatprep.subr.mxu0 0.0
  %95 = vmatpush1.msra.mxu0 0.0
  %96 = vmatprep.subr.mxu0 0.0
  %97 = vmatpush1.msra.mxu0 0.0
  %98 = vmatprep.subr.mxu0 0.0
  %99 = vmatpush1.msra.mxu0 0.0
  %100 = vmatprep.subr.mxu0 0.0
  %101 = vmatpush1.msra.mxu0 0.0
  %102 = vmatprep.subr.mxu0 0.0
  %103 = vmatpush1.msra.mxu0 0.0
  %104 = vmatprep.subr.mxu0 0.0
  %105 = vmatpush1.msra.mxu0 0.0
  %106 = vmatprep.subr.mxu0 0.0
  %107 = vmatpush1.msra.mxu0 0.0
  %108 = vmatprep.subr.mxu0 0.0
  %109 = vmatpush1.msra.mxu0 0.0
  %110 = vmatprep.subr.mxu0 0.0
  %111 = vmatpush1.msra.mxu0 0.0
  %112 = vmatprep.subr.mxu0 0.0
  %113 = vmatpush1.msra.mxu0 0.0
  %114 = vmatprep.subr.mxu0 0.0
  %115 = vmatpush1.msra.mxu0 0.0
  %116 = vmatprep.subr.mxu0 0.0
  %117 = vmatpush1.msra.mxu0 0.0
  %118 = vmatprep.subr.mxu0 0.0
  %119 = vmatpush1.msra.mxu0 0.0
  %120 = vmatprep.subr.mxu0 0.0
  %121 = vmatpush1.msra.mxu0 0.0
  %122 = vmatprep.subr.mxu0 0.0
  %123 = vmatpush1.msra.mxu0 0.0
  %124 = vmatprep.subr.mxu0 0.0
  %125 = vmatpush1.msra.mxu0 0.0
  %126 = vmatprep.subr.mxu0 0.0
  %127 = vmatpush1.msra.mxu0 0.0
  %128 = vmatprep.mubr.f32.mxu0 0.0
  %129 = vmatmul.mubr.f32.gmra.mrb[0].mxu0 %v62
  %v130 = vpop.f32.mrb[0].mxu0
  %v131 = vadd.f32 %v60, %v130
  %v132 = vpop.f32.mrb[0].mxu0
  %133 = vdwg.mxu0
  %vm134 = vcmp.gt.f32.partialorder %v131, 0.0
  %v135 = vmul.f32 %v131, 0.01
  %v136 = vsel %vm134, %v131, %v135
  %v137 = vld [vmem:[%s1 + $0x10] sm:$0xff]
  %v138 = vld [vmem:[%s1 + $0x18] sm:$0xff]
  %v139 = vld [vmem:[%s1 + $0x20] sm:$0xff]
  %v140 = vld [vmem:[%s1 + $0x28] sm:$0xff]
  %v141 = vld [vmem:[%s1 + $0x30] sm:$0xff]
  %v142 = vld [vmem:[%s1 + $0x38] sm:$0xff]
  %v143 = vld [vmem:[%s1 + $0x40] sm:$0xff]
  %v144 = vld [vmem:[%s1 + $0x48] sm:$0xff]
  %v145 = vld [vmem:[%s1 + $0x50] sm:$0xff]
  %v146 = vld [vmem:[%s1 + $0x58] sm:$0xff]
  %v147 = vld [vmem:[%s1 + $0x60] sm:$0xff]
  %v148 = vld [vmem:[%s1 + $0x68] sm:$0xff]
  %v149 = vld [vmem:[%s1 + $0x70] sm:$0xff]
  %v150 = vld [vmem:[%s1 + $0x78] sm:$0xff]
  %v151 = vld [vmem:[%s1 + $0x80] sm:$0xff]
  %v152 = vld [vmem:[%s1 + $0x88] sm:$0xff]
  %v153 = vld [vmem:[%s2 + $0x1] sm:$0x1]
  %v154 = vlaneseq
  %v155 = vshrl.u32 %v154, 7
  %v156 = vsub.s32 0, %v155
  %v157 = vrot.slane %v153, %v156
  %158 = vmatprep.subr.mxu0 0.0
  %159 = vmatpush1.msra.mxu0 %v137
  %160 = vmatprep.subr.mxu0 0.0
  %161 = vmatpush1.msra.mxu0 %v138
  %162 = vmatprep.subr.mxu0 0.0
  %163 = vmatpush1.msra.mxu0 %v139
  %164 = vmatprep.subr.mxu0 0.0
  %165 = vmatpush1.msra.mxu0 %v140
  %166 = vmatprep.subr.mxu0 0.0
  %167 = vmatpush1.msra.mxu0 %v141
  %168 = vmatprep.subr.mxu0 0.0
  %169 = vmatpush1.msra.mxu0 %v142
  %170 = vmatprep.subr.mxu0 0.0
  %171 = vmatpush1.msra.mxu0 %v143
  %172 = vmatprep.subr.mxu0 0.0
  %173 = vmatpush1.msra.mxu0 %v144
  %174 = vmatprep.subr.mxu0 0.0
  %175 = vmatpush1.msra.mxu0 %v145
  %176 = vmatprep.subr.mxu0 0.0
  %177 = vmatpush1.msra.mxu0 %v146
  %178 = vmatprep.subr.mxu0 0.0
  %179 = vmatpush1.msra.mxu0 %v147
  %180 = vmatprep.subr.mxu0 0.0
  %181 = vmatpush1.msra.mxu0 %v148
  %182 = vmatprep.subr.mxu0 0.0
  %183 = vmatpush1.msra.mxu0 %v149
  %184 = vmatprep.subr.mxu0 0.0
  %185 = vmatpush1.msra.mxu0 %v150
  %186 = vmatprep.subr.mxu0 0.0
  %187 = vmatpush1.msra.mxu0 %v151
  %188 = vmatprep.subr.mxu0 0.0
  %189 = vmatpush1.msra.mxu0 %v152
  %190 = vmatprep.subr.mxu0 0.0
  %191 = vmatpush1.msra.mxu0 0.0
  %192 = vmatprep.subr.mxu0 0.0
  %193 = vmatpush1.msra.mxu0 0.0
  %194 = vmatprep.subr.mxu0 0.0
  %195 = vmatpush1.msra.mxu0 0.0
  %196 = vmatprep.subr.mxu0 0.0
  %197 = vmatpush1.msra.mxu0 0.0
  %198 = vmatprep.subr.mxu0 0.0
  %199 = vmatpush1.msra.mxu0 0.0
  %200 = vmatprep.subr.mxu0 0.0
  %201 = vmatpush1.msra.mxu0 0.0
  %202 = vmatprep.subr.mxu0 0.0
  %203 = vmatpush1.msra.mxu0 0.0
  %204 = vmatprep.subr.mxu0 0.0
  %205 = vmatpush1.msra.mxu0 0.0
  %206 = vmatprep.subr.mxu0 0.0
  %207 = vmatpush1.msra.mxu0 0.0
  %208 = vmatprep.subr.mxu0 0.0
  %209 = vmatpush1.msra.mxu0 0.0
  %210 = vmatprep.subr.mxu0 0.0
  %211 = vmatpush1.msra.mxu0 0.0
  %212 = vmatprep.subr.mxu0 0.0
  %213 = vmatpush1.msra.mxu0 0.0
  %214 = vmatprep.subr.mxu0 0.0
  %215 = vmatpush1.msra.mxu0 0.0
  %216 = vmatprep.subr.mxu0 0.0
  %217 = vmatpush1.msra.mxu0 0.0
  %218 = vmatprep.subr.mxu0 0.0
  %219 = vmatpush1.msra.mxu0 0.0
  %220 = vmatprep.subr.mxu0 0.0
  %221 = vmatpush1.msra.mxu0 0.0
  %222 = vmatprep.mubr.f32.mxu0 0.0
  %223 = vmatmul.mubr.f32.gmra.mrb[0].mxu0 %v136
  %v224 = vpop.f32.mrb[0].mxu0
  %v225 = vadd.f32 %v157, %v224
  %v226 = vpop.f32.mrb[0].mxu0
  %227 = vdwg.mxu0
  %v228 = vmul.f32 %v225, %v14
  %v229 = vsel %vm20, %v228, 0.0
  %vm230 = vcmask 64512
  %v232 = vsel %vm230, %v25, 0
  %234 = vmatprep.subr.mxu0 0.0
  %235 = vmatpush1.msra.mxu0 %v229
  %236 = vmatprep.subr.mxu0 0.0
  %237 = vmatpush1.msra.mxu0 0.0
  %238 = vmatprep.subr.mxu0 0.0
  %239 = vmatpush1.msra.mxu0 0.0
  %240 = vmatprep.subr.mxu0 0.0
  %241 = vmatpush1.msra.mxu0 0.0
  %242 = vmatprep.subr.mxu0 0.0
  %243 = vmatpush1.msra.mxu0 0.0
  %244 = vmatprep.subr.mxu0 0.0
  %245 = vmatpush1.msra.mxu0 0.0
  %246 = vmatprep.subr.mxu0 0.0
  %247 = vmatpush1.msra.mxu0 0.0
  %248 = vmatprep.subr.mxu0 0.0
  %249 = vmatpush1.msra.mxu0 0.0
  %250 = vmatprep.subr.mxu0 0.0
  %251 = vmatpush1.msra.mxu0 0.0
  %252 = vmatprep.subr.mxu0 0.0
  %253 = vmatpush1.msra.mxu0 0.0
  %254 = vmatprep.subr.mxu0 0.0
  %255 = vmatpush1.msra.mxu0 0.0
  %256 = vmatprep.subr.mxu0 0.0
  %257 = vmatpush1.msra.mxu0 0.0
  %258 = vmatprep.subr.mxu0 0.0
  %259 = vmatpush1.msra.mxu0 0.0
  %260 = vmatprep.subr.mxu0 0.0
  %261 = vmatpush1.msra.mxu0 0.0
  %262 = vmatprep.subr.mxu0 0.0
  %263 = vmatpush1.msra.mxu0 0.0
  %264 = vmatprep.subr.mxu0 0.0
  %265 = vmatpush1.msra.mxu0 0.0
  %266 = vmatprep.subr.mxu0 0.0
  %267 = vmatpush1.msra.mxu0 0.0
  %268 = vmatprep.subr.mxu0 0.0
  %269 = vmatpush1.msra.mxu0 0.0
  %270 = vmatprep.subr.mxu0 0.0
  %271 = vmatpush1.msra.mxu0 0.0
  %272 = vmatprep.subr.mxu0 0.0
  %273 = vmatpush1.msra.mxu0 0.0
  %274 = vmatprep.subr.mxu0 0.0
  %275 = vmatpush1.msra.mxu0 0.0
  %276 = vmatprep.subr.mxu0 0.0
  %277 = vmatpush1.msra.mxu0 0.0
  %278 = vmatprep.subr.mxu0 0.0
  %279 = vmatpush1.msra.mxu0 0.0
  %280 = vmatprep.subr.mxu0 0.0
  %281 = vmatpush1.msra.mxu0 0.0
  %282 = vmatprep.subr.mxu0 0.0
  %283 = vmatpush1.msra.mxu0 0.0
  %284 = vmatprep.subr.mxu0 0.0
  %285 = vmatpush1.msra.mxu0 0.0
  %286 = vmatprep.subr.mxu0 0.0
  %287 = vmatpush1.msra.mxu0 0.0
  %288 = vmatprep.subr.mxu0 0.0
  %289 = vmatpush1.msra.mxu0 0.0
  %290 = vmatprep.subr.mxu0 0.0
  %291 = vmatpush1.msra.mxu0 0.0
  %292 = vmatprep.subr.mxu0 0.0
  %293 = vmatpush1.msra.mxu0 0.0
  %294 = vmatprep.subr.mxu0 0.0
  %295 = vmatpush1.msra.mxu0 0.0
  %296 = vmatprep.subr.mxu0 0.0
  %297 = vmatpush1.msra.mxu0 0.0
  %298 = vmatprep.mubr.f32.mxu0 0.0
  %299 = vmatmul.mubr.f32.gmra.mrb[0].mxu0 %v232
  %v300 = vpop.f32.mrb[0].mxu0
  %v301 = vadd.f32 0.0, %v300
  %v302 = vpop.f32.mrb[0].mxu0
  %303 = vdwg.mxu0
  %v304 = vsel %vm20, %v301, %v14
  %vm305 = vcmask 523264
  %v306 = vsel %vm305, %v304, 0.0
  %v307 = vrot.slane %v306, 4
  %v308 = vadd.f32 %v306, %v307
  %v309 = vrot.slane %v308, 2
  %v310 = vadd.f32 %v308, %v309
  %v311 = vrot.slane %v310, 1
  %v312 = vadd.f32 %v310, %v311
  %v313 = vmul.f32 %v312, 0.125
  %v314 = vmul.f32 %v304, %v304
  %v315 = vsel %vm305, %v314, 0.0
  %v316 = vrot.slane %v315, 4
  %v317 = vadd.f32 %v315, %v316
  %v318 = vrot.slane %v317, 2
  %v319 = vadd.f32 %v317, %v318
  %v320 = vrot.slane %v319, 1
  %v321 = vadd.f32 %v319, %v320
  %v322 = vmul.f32 %v321, 0.125
  %v323 = vmul.f32 %v313, %v313
  %v324 = vsub.f32 %v322, %v323
  %v325 = vsub.f32 %v304, %v313
  %v326 = vadd.f32 %v324, 1e-05
  %v327 = vrsqrt.pop %v326
  %v328 = vmul.f32 %v325, %v327
  %v329 = vld [vmem:[%s1 + $0x90] sm:$0xff]
  %v330 = vld [vmem:[%s1 + $0x98] sm:$0xff]
  %v331 = vld [vmem:[%s1 + $0xa0] sm:$0xff]
  %v332 = vld [vmem:[%s1 + $0xa8] sm:$0xff]
  %v333 = vld [vmem:[%s1 + $0xb0] sm:$0xff]
  %v334 = vld [vmem:[%s1 + $0xb8] sm:$0xff]
  %v335 = vld [vmem:[%s1 + $0xc0] sm:$0xff]
  %v336 = vld [vmem:[%s1 + $0xc8] sm:$0xff]
  %v337 = vld [vmem:[%s2 + $0x2] sm:$0x1]
  %v338 = vlaneseq
  %v339 = vshrl.u32 %v338, 7
  %v340 = vsub.s32 0, %v339
  %v341 = vrot.slane %v337, %v340
  %v343 = vsel %vm305, %v328, 0
  %345 = vmatprep.subr.mxu0 0.0
  %346 = vmatpush1.msra.mxu0 %v329
  %347 = vmatprep.subr.mxu0 0.0
  %348 = vmatpush1.msra.mxu0 %v330
  %349 = vmatprep.subr.mxu0 0.0
  %350 = vmatpush1.msra.mxu0 %v331
  %351 = vmatprep.subr.mxu0 0.0
  %352 = vmatpush1.msra.mxu0 %v332
  %353 = vmatprep.subr.mxu0 0.0
  %354 = vmatpush1.msra.mxu0 %v333
  %355 = vmatprep.subr.mxu0 0.0
  %356 = vmatpush1.msra.mxu0 %v334
  %357 = vmatprep.subr.mxu0 0.0
  %358 = vmatpush1.msra.mxu0 %v335
  %359 = vmatprep.subr.mxu0 0.0
  %360 = vmatpush1.msra.mxu0 %v336
  %361 = vmatprep.subr.mxu0 0.0
  %362 = vmatpush1.msra.mxu0 0.0
  %363 = vmatprep.subr.mxu0 0.0
  %364 = vmatpush1.msra.mxu0 0.0
  %365 = vmatprep.subr.mxu0 0.0
  %366 = vmatpush1.msra.mxu0 0.0
  %367 = vmatprep.subr.mxu0 0.0
  %368 = vmatpush1.msra.mxu0 0.0
  %369 = vmatprep.subr.mxu0 0.0
  %370 = vmatpush1.msra.mxu0 0.0
  %371 = vmatprep.subr.mxu0 0.0
  %372 = vmatpush1.msra.mxu0 0.0
  %373 = vmatprep.subr.mxu0 0.0
  %374 = vmatpush1.msra.mxu0 0.0
  %375 = vmatprep.subr.mxu0 0.0
  %376 = vmatpush1.msra.mxu0 0.0
  %377 = vmatprep.subr.mxu0 0.0
  %378 = vmatpush1.msra.mxu0 0.0
  %379 = vmatprep.subr.mxu0 0.0
  %380 = vmatpush1.msra.mxu0 0.0
  %381 = vmatprep.subr.mxu0 0.0
  %382 = vmatpush1.msra.mxu0 0.0
  %383 = vmatprep.subr.mxu0 0.0
  %384 = vmatpush1.msra.mxu0 0.0
  %385 = vmatprep.subr.mxu0 0.0
  %386 = vmatpush1.msra.mxu0 0.0
  %387 = vmatprep.subr.mxu0 0.0
  %388 = vmatpush1.msra.mxu0 0.0
  %389 = vmatprep.subr.mxu0 0.0
  %390 = vmatpush1.msra.mxu0 0.0
  %391 = vmatprep.subr.mxu0 0.0
  %392 = vmatpush1.msra.mxu0 0.0
  %393 = vmatprep.subr.mxu0 0.0
  %394 = vmatpush1.msra.mxu0 0.0
  %395 = vmatprep.subr.mxu0 0.0
  %396 = vmatpush1.msra.mxu0 0.0
  %397 = vmatprep.subr.mxu0 0.0
  %398 = vmatpush1.msra.mxu0 0.0
  %399 = vmatprep.subr.mxu0 0.0
  %400 = vmatpush1.msra.mxu0 0.0
  %401 = vmatprep.subr.mxu0 0.0
  %402 = vmatpush1.msra.mxu0 0.0
  %403 = vmatprep.subr.mxu0 0.0
  %404 = vmatpush1.msra.mxu0 0.0
  %405 = vmatprep.subr.mxu0 0.0
  %406 = vmatpush1.msra.mxu0 0.0
  %407 = vmatprep.subr.mxu0 0.0
  %408 = vmatpush1.msra.mxu0 0.0
  %409 = vmatprep.mubr.f32.mxu0 0.0
  %410 = vmatmul.mubr.f32.gmra.mrb[0].mxu0 %v343
  %v411 = vpop.f32.mrb[0].mxu0
  %v412 = vadd.f32 %v341, %v411
  %v413 = vpop.f32.mrb[0].mxu0
  %414 = vdwg.mxu0
  %vm415 = vcmp.gt.f32.partialorder %v412, 0.0
  %v416 = vmul.f32 %v412, 0.01
  %v417 = vsel %vm415, %v412, %v416
  %v418 = vld [vmem:[%s1 + $0xd0] sm:$0xff]
  %v419 = vld [vmem:[%s1 + $0xd8] sm:$0xff]
  %v420 = vld [vmem:[%s1 + $0xe0] sm:$0xff]
  %v421 = vld [vmem:[%s1 + $0xe8] sm:$0xff]
  %v422 = vld [vmem:[%s1 + $0xf0] sm:$0xff]
  %v423 = vld [vmem:[%s1 + $0xf8] sm:$0xff]
  %v424 = vld [vmem:[%s1 + $0x100] sm:$0xff]
  %v425 = vld [vmem:[%s1 + $0x108] sm:$0xff]
  %v426 = vld [vmem:[%s1 + $0x110] sm:$0xff]
  %v427 = vld [vmem:[%s1 + $0x118] sm:$0xff]
  %v428 = vld [vmem:[%s1 + $0x120] sm:$0xff]
  %v429 = vld [vmem:[%s1 + $0x128] sm:$0xff]
  %v430 = vld [vmem:[%s1 + $0x130] sm:$0xff]
  %v431 = vld [vmem:[%s1 + $0x138] sm:$0xff]
  %v432 = vld [vmem:[%s1 + $0x140] sm:$0xff]
  %v433 = vld [vmem:[%s1 + $0x148] sm:$0xff]
  %v434 = vld [vmem:[%s2 + $0x3] sm:$0x1]
  %v435 = vlaneseq
  %v436 = vshrl.u32 %v435, 7
  %v437 = vsub.s32 0, %v436
  %v438 = vrot.slane %v434, %v437
  %439 = vmatprep.subr.mxu0 0.0
  %440 = vmatpush1.msra.mxu0 %v418
  %441 = vmatprep.subr.mxu0 0.0
  %442 = vmatpush1.msra.mxu0 %v419
  %443 = vmatprep.subr.mxu0 0.0
  %444 = vmatpush1.msra.mxu0 %v420
  %445 = vmatprep.subr.mxu0 0.0
  %446 = vmatpush1.msra.mxu0 %v421
  %447 = vmatprep.subr.mxu0 0.0
  %448 = vmatpush1.msra.mxu0 %v422
  %449 = vmatprep.subr.mxu0 0.0
  %450 = vmatpush1.msra.mxu0 %v423
  %451 = vmatprep.subr.mxu0 0.0
  %452 = vmatpush1.msra.mxu0 %v424
  %453 = vmatprep.subr.mxu0 0.0
  %454 = vmatpush1.msra.mxu0 %v425
  %455 = vmatprep.subr.mxu0 0.0
  %456 = vmatpush1.msra.mxu0 %v426
  %457 = vmatprep.subr.mxu0 0.0
  %458 = vmatpush1.msra.mxu0 %v427
  %459 = vmatprep.subr.mxu0 0.0
  %460 = vmatpush1.msra.mxu0 %v428
  %461 = vmatprep.subr.mxu0 0.0
  %462 = vmatpush1.msra.mxu0 %v429
  %463 = vmatprep.subr.mxu0 0.0
  %464 = vmatpush1.msra.mxu0 %v430
  %465 = vmatprep.subr.mxu0 0.0
  %466 = vmatpush1.msra.mxu0 %v431
  %467 = vmatprep.subr.mxu0 0.0
  %468 = vmatpush1.msra.mxu0 %v432
  %469 = vmatprep.subr.mxu0 0.0
  %470 = vmatpush1.msra.mxu0 %v433
  %471 = vmatprep.subr.mxu0 0.0
  %472 = vmatpush1.msra.mxu0 0.0
  %473 = vmatprep.subr.mxu0 0.0
  %474 = vmatpush1.msra.mxu0 0.0
  %475 = vmatprep.subr.mxu0 0.0
  %476 = vmatpush1.msra.mxu0 0.0
  %477 = vmatprep.subr.mxu0 0.0
  %478 = vmatpush1.msra.mxu0 0.0
  %479 = vmatprep.subr.mxu0 0.0
  %480 = vmatpush1.msra.mxu0 0.0
  %481 = vmatprep.subr.mxu0 0.0
  %482 = vmatpush1.msra.mxu0 0.0
  %483 = vmatprep.subr.mxu0 0.0
  %484 = vmatpush1.msra.mxu0 0.0
  %485 = vmatprep.subr.mxu0 0.0
  %486 = vmatpush1.msra.mxu0 0.0
  %487 = vmatprep.subr.mxu0 0.0
  %488 = vmatpush1.msra.mxu0 0.0
  %489 = vmatprep.subr.mxu0 0.0
  %490 = vmatpush1.msra.mxu0 0.0
  %491 = vmatprep.subr.mxu0 0.0
  %492 = vmatpush1.msra.mxu0 0.0
  %493 = vmatprep.subr.mxu0 0.0
  %494 = vmatpush1.msra.mxu0 0.0
  %495 = vmatprep.subr.mxu0 0.0
  %496 = vmatpush1.msra.mxu0 0.0
  %497 = vmatprep.subr.mxu0 0.0
  %498 = vmatpush1.msra.mxu0 0.0
  %499 = vmatprep.subr.mxu0 0.0
  %500 = vmatpush1.msra.mxu0 0.0
  %501 = vmatprep.subr.mxu0 0.0
  %502 = vmatpush1.msra.mxu0 0.0
  %503 = vmatprep.mubr.f32.mxu0 0.0
  %504 = vmatmul.mubr.f32.gmra.mrb[0].mxu0 %v417
  %v505 = vpop.f32.mrb[0].mxu0
  %v506 = vadd.f32 %v438, %v505
  %v507 = vpop.f32.mrb[0].mxu0
  %508 = vdwg.mxu0
  %v509 = vld [vmem:[%s1 + $0x150] sm:$0xff]
  %v510 = vld [vmem:[%s1 + $0x158] sm:$0xff]
  %v511 = vld [vmem:[%s1 + $0x160] sm:$0xff]
  %v512 = vld [vmem:[%s1 + $0x168] sm:$0xff]
  %v513 = vld [vmem:[%s1 + $0x170] sm:$0xff]
  %v514 = vld [vmem:[%s1 + $0x178] sm:$0xff]
  %v515 = vld [vmem:[%s1 + $0x180] sm:$0xff]
  %v516 = vld [vmem:[%s1 + $0x188] sm:$0xff]
  %v517 = vld [vmem:[%s1 + $0x190] sm:$0xff]
  %v518 = vld [vmem:[%s1 + $0x198] sm:$0xff]
  %v519 = vld [vmem:[%s1 + $0x1a0] sm:$0xff]
  %v520 = vld [vmem:[%s1 + $0x1a8] sm:$0xff]
  %v521 = vld [vmem:[%s1 + $0x1b0] sm:$0xff]
  %v522 = vld [vmem:[%s1 + $0x1b8] sm:$0xff]
  %v523 = vld [vmem:[%s1 + $0x1c0] sm:$0xff]
  %v524 = vld [vmem:[%s1 + $0x1c8] sm:$0xff]
  %v525 = vld [vmem:[%s2 + $0x4] sm:$0x1]
  %v526 = vlaneseq
  %v527 = vshrl.u32 %v526, 7
  %v528 = vsub.s32 0, %v527
  %v529 = vrot.slane %v525, %v528
  %530 = vmatprep.subr.mxu0 0.0
  %531 = vmatpush1.msra.mxu0 %v509
  %532 = vmatprep.subr.mxu0 0.0
  %533 = vmatpush1.msra.mxu0 %v510
  %534 = vmatprep.subr.mxu0 0.0
  %535 = vmatpush1.msra.mxu0 %v511
  %536 = vmatprep.subr.mxu0 0.0
  %537 = vmatpush1.msra.mxu0 %v512
  %538 = vmatprep.subr.mxu0 0.0
  %539 = vmatpush1.msra.mxu0 %v513
  %540 = vmatprep.subr.mxu0 0.0
  %541 = vmatpush1.msra.mxu0 %v514
  %542 = vmatprep.subr.mxu0 0.0
  %543 = vmatpush1.msra.mxu0 %v515
  %544 = vmatprep.subr.mxu0 0.0
  %545 = vmatpush1.msra.mxu0 %v516
  %546 = vmatprep.subr.mxu0 0.0
  %547 = vmatpush1.msra.mxu0 %v517
  %548 = vmatprep.subr.mxu0 0.0
  %549 = vmatpush1.msra.mxu0 %v518
  %550 = vmatprep.subr.mxu0 0.0
  %551 = vmatpush1.msra.mxu0 %v519
  %552 = vmatprep.subr.mxu0 0.0
  %553 = vmatpush1.msra.mxu0 %v520
  %554 = vmatprep.subr.mxu0 0.0
  %555 = vmatpush1.msra.mxu0 %v521
  %556 = vmatprep.subr.mxu0 0.0
  %557 = vmatpush1.msra.mxu0 %v522
  %558 = vmatprep.subr.mxu0 0.0
  %559 = vmatpush1.msra.mxu0 %v523
  %560 = vmatprep.subr.mxu0 0.0
  %561 = vmatpush1.msra.mxu0 %v524
  %562 = vmatprep.subr.mxu0 0.0
  %563 = vmatpush1.msra.mxu0 0.0
  %564 = vmatprep.subr.mxu0 0.0
  %565 = vmatpush1.msra.mxu0 0.0
  %566 = vmatprep.subr.mxu0 0.0
  %567 = vmatpush1.msra.mxu0 0.0
  %568 = vmatprep.subr.mxu0 0.0
  %569 = vmatpush1.msra.mxu0 0.0
  %570 = vmatprep.subr.mxu0 0.0
  %571 = vmatpush1.msra.mxu0 0.0
  %572 = vmatprep.subr.mxu0 0.0
  %573 = vmatpush1.msra.mxu0 0.0
  %574 = vmatprep.subr.mxu0 0.0
  %575 = vmatpush1.msra.mxu0 0.0
  %576 = vmatprep.subr.mxu0 0.0
  %577 = vmatpush1.msra.mxu0 0.0
  %578 = vmatprep.subr.mxu0 0.0
  %579 = vmatpush1.msra.mxu0 0.0
  %580 = vmatprep.subr.mxu0 0.0
  %581 = vmatpush1.msra.mxu0 0.0
  %582 = vmatprep.subr.mxu0 0.0
  %583 = vmatpush1.msra.mxu0 0.0
  %584 = vmatprep.subr.mxu0 0.0
  %585 = vmatpush1.msra.mxu0 0.0
  %586 = vmatprep.subr.mxu0 0.0
  %587 = vmatpush1.msra.mxu0 0.0
  %588 = vmatprep.subr.mxu0 0.0
  %589 = vmatpush1.msra.mxu0 0.0
  %590 = vmatprep.subr.mxu0 0.0
  %591 = vmatpush1.msra.mxu0 0.0
  %592 = vmatprep.subr.mxu0 0.0
  %593 = vmatpush1.msra.mxu0 0.0
  %594 = vmatprep.mubr.f32.mxu0 0.0
  %595 = vmatmul.mubr.f32.gmra.mrb[0].mxu0 %v506
  %v596 = vpop.f32.mrb[0].mxu0
  %v597 = vadd.f32 %v529, %v596
  %v598 = vpop.f32.mrb[0].mxu0
  %599 = vdwg.mxu0
  %vm600 = vcmp.gt.f32.partialorder %v597, 0.0
  %v601 = vmul.f32 %v597, 0.01
  %v602 = vsel %vm600, %v597, %v601
  %603 = vmatprep.subr.mxu0 0.0
  %604 = vmatpush1.msra.mxu0 %v137
  %605 = vmatprep.subr.mxu0 0.0
  %606 = vmatpush1.msra.mxu0 %v138
  %607 = vmatprep.subr.mxu0 0.0
  %608 = vmatpush1.msra.mxu0 %v139
  %609 = vmatprep.subr.mxu0 0.0
  %610 = vmatpush1.msra.mxu0 %v140
  %611 = vmatprep.subr.mxu0 0.0
  %612 = vmatpush1.msra.mxu0 %v141
  %613 = vmatprep.subr.mxu0 0.0
  %614 = vmatpush1.msra.mxu0 %v142
  %615 = vmatprep.subr.mxu0 0.0
  %616 = vmatpush1.msra.mxu0 %v143
  %617 = vmatprep.subr.mxu0 0.0
  %618 = vmatpush1.msra.mxu0 %v144
  %619 = vmatprep.subr.mxu0 0.0
  %620 = vmatpush1.msra.mxu0 %v145
  %621 = vmatprep.subr.mxu0 0.0
  %622 = vmatpush1.msra.mxu0 %v146
  %623 = vmatprep.subr.mxu0 0.0
  %624 = vmatpush1.msra.mxu0 %v147
  %625 = vmatprep.subr.mxu0 0.0
  %626 = vmatpush1.msra.mxu0 %v148
  %627 = vmatprep.subr.mxu0 0.0
  %628 = vmatpush1.msra.mxu0 %v149
  %629 = vmatprep.subr.mxu0 0.0
  %630 = vmatpush1.msra.mxu0 %v150
  %631 = vmatprep.subr.mxu0 0.0
  %632 = vmatpush1.msra.mxu0 %v151
  %633 = vmatprep.subr.mxu0 0.0
  %634 = vmatpush1.msra.mxu0 %v152
  %635 = vmatprep.subr.mxu0 0.0
  %636 = vmatpush1.msra.mxu0 0.0
  %637 = vmatprep.subr.mxu0 0.0
  %638 = vmatpush1.msra.mxu0 0.0
  %639 = vmatprep.subr.mxu0 0.0
  %640 = vmatpush1.msra.mxu0 0.0
  %641 = vmatprep.subr.mxu0 0.0
  %642 = vmatpush1.msra.mxu0 0.0
  %643 = vmatprep.subr.mxu0 0.0
  %644 = vmatpush1.msra.mxu0 0.0
  %645 = vmatprep.subr.mxu0 0.0
  %646 = vmatpush1.msra.mxu0 0.0
  %647 = vmatprep.subr.mxu0 0.0
  %648 = vmatpush1.msra.mxu0 0.0
  %649 = vmatprep.subr.mxu0 0.0
  %650 = vmatpush1.msra.mxu0 0.0
  %651 = vmatprep.subr.mxu0 0.0
  %652 = vmatpush1.msra.mxu0 0.0
  %653 = vmatprep.subr.mxu0 0.0
  %654 = vmatpush1.msra.mxu0 0.0
  %655 = vmatprep.subr.mxu0 0.0
  %656 = vmatpush1.msra.mxu0 0.0
  %657 = vmatprep.subr.mxu0 0.0
  %658 = vmatpush1.msra.mxu0 0.0
  %659 = vmatprep.subr.mxu0 0.0
  %660 = vmatpush1.msra.mxu0 0.0
  %661 = vmatprep.subr.mxu0 0.0
  %662 = vmatpush1.msra.mxu0 0.0
  %663 = vmatprep.subr.mxu0 0.0
  %664 = vmatpush1.msra.mxu0 0.0
  %665 = vmatprep.subr.mxu0 0.0
  %666 = vmatpush1.msra.mxu0 0.0
  %667 = vmatprep.mubr.f32.mxu0 0.0
  %668 = vmatmul.mubr.f32.gmra.mrb[0].mxu0 %v602
  %v669 = vpop.f32.mrb[0].mxu0
  %v670 = vadd.f32 %v157, %v669
  %v671 = vpop.f32.mrb[0].mxu0
  %672 = vdwg.mxu0
  %v674 = vsel %vm230, %v29, 0
  %676 = vmatprep.subr.mxu0 0.0
  %677 = vmatpush1.msra.mxu0 %v670
  %678 = vmatprep.subr.mxu0 0.0
  %679 = vmatpush1.msra.mxu0 0.0
  %680 = vmatprep.subr.mxu0 0.0
  %681 = vmatpush1.msra.mxu0 0.0
  %682 = vmatprep.subr.mxu0 0.0
  %683 = vmatpush1.msra.mxu0 0.0
  %684 = vmatprep.subr.mxu0 0.0
  %685 = vmatpush1.msra.mxu0 0.0
  %686 = vmatprep.subr.mxu0 0.0
  %687 = vmatpush1.msra.mxu0 0.0
  %688 = vmatprep.subr.mxu0 0.0
  %689 = vmatpush1.msra.mxu0 0.0
  %690 = vmatprep.subr.mxu0 0.0
  %691 = vmatpush1.msra.mxu0 0.0
  %692 = vmatprep.subr.mxu0 0.0
  %693 = vmatpush1.msra.mxu0 0.0
  %694 = vmatprep.subr.mxu0 0.0
  %695 = vmatpush1.msra.mxu0 0.0
  %696 = vmatprep.subr.mxu0 0.0
  %697 = vmatpush1.msra.mxu0 0.0
  %698 = vmatprep.subr.mxu0 0.0
  %699 = vmatpush1.msra.mxu0 0.0
  %700 = vmatprep.subr.mxu0 0.0
  %701 = vmatpush1.msra.mxu0 0.0
  %702 = vmatprep.subr.mxu0 0.0
  %703 = vmatpush1.msra.mxu0 0.0
  %704 = vmatprep.subr.mxu0 0.0
  %705 = vmatpush1.msra.mxu0 0.0
  %706 = vmatprep.subr.mxu0 0.0
  %707 = vmatpush1.msra.mxu0 0.0
  %708 = vmatprep.subr.mxu0 0.0
  %709 = vmatpush1.msra.mxu0 0.0
  %710 = vmatprep.subr.mxu0 0.0
  %711 = vmatpush1.msra.mxu0 0.0
  %712 = vmatprep.subr.mxu0 0.0
  %713 = vmatpush1.msra.mxu0 0.0
  %714 = vmatprep.subr.mxu0 0.0
  %715 = vmatpush1.msra.mxu0 0.0
  %716 = vmatprep.subr.mxu0 0.0
  %717 = vmatpush1.msra.mxu0 0.0
  %718 = vmatprep.subr.mxu0 0.0
  %719 = vmatpush1.msra.mxu0 0.0
  %720 = vmatprep.subr.mxu0 0.0
  %721 = vmatpush1.msra.mxu0 0.0
  %722 = vmatprep.subr.mxu0 0.0
  %723 = vmatpush1.msra.mxu0 0.0
  %724 = vmatprep.subr.mxu0 0.0
  %725 = vmatpush1.msra.mxu0 0.0
  %726 = vmatprep.subr.mxu0 0.0
  %727 = vmatpush1.msra.mxu0 0.0
  %728 = vmatprep.subr.mxu0 0.0
  %729 = vmatpush1.msra.mxu0 0.0
  %730 = vmatprep.subr.mxu0 0.0
  %731 = vmatpush1.msra.mxu0 0.0
  %732 = vmatprep.subr.mxu0 0.0
  %733 = vmatpush1.msra.mxu0 0.0
  %734 = vmatprep.subr.mxu0 0.0
  %735 = vmatpush1.msra.mxu0 0.0
  %736 = vmatprep.subr.mxu0 0.0
  %737 = vmatpush1.msra.mxu0 0.0
  %738 = vmatprep.subr.mxu0 0.0
  %739 = vmatpush1.msra.mxu0 0.0
  %740 = vmatprep.mubr.f32.mxu0 0.0
  %741 = vmatmul.mubr.f32.gmra.mrb[0].mxu0 %v674
  %v742 = vpop.f32.mrb[0].mxu0
  %v743 = vadd.f32 0.0, %v742
  %v744 = vpop.f32.mrb[0].mxu0
  %745 = vdwg.mxu0
  %747 = vrot.lane.b32.xlu0 %v743, 6
  %v748 = vpop.permute.xlu0 %747
  %v750 = vadd.f32 %v14, %v748
  %752 = vrot.lane.b32.xlu0 %v14, 10
  %v753 = vpop.permute.xlu0 %752
  %v755 = vsub.f32 %v750, %v753
  %756 = vrot.lane.b32.xlu0 %v14, 6
  %v757 = vpop.permute.xlu0 %756
  %v759 = vmul.f32 %v755, %v757
  %761 = vrot.lane.b32.xlu0 %v759, 54
  %v762 = vpop.permute.xlu0 %761
  %vm764 = vcmask 31744
  %v765 = vsel %vm764, %v762, 0.0
  %766 = vadd.xlane.f32.xlu0 %v765
  %v767 = vpop.xlane.xlu0 %766
  %v768 = vmul.f32 %v14, -1.702
  %v769 = vmul.f32 %v768, %v767
  %v770 = vmul.f32 %v769, 1.442695
  %v771 = vpow.pop %v770
  %v772 = vadd.f32 %v771, 1.0
  %v773 = vsub.f32 1.0, %v14
  %v774 = vrcp.pop %v772
  %776 = vrot.lane.b32.xlu0 %v774, 1
  %v777 = vpop.permute.xlu0 %776
  %v779 = vmul.f32 %v773, %v777
  %v780 = vadd.f32 %v14, %v779
  %vm781 = vcmp.ge.s32.totalorder %v16, 64
  %vm782 = vcmp.lt.s32.totalorder %v16, 68
  %vm783 = vmand %vm781, %vm782
  %vm784 = vcmp.ge.s32.totalorder %v16, 68
  %vm785 = vcmp.lt.s32.totalorder %v16, 72
  %vm786 = vmand %vm784, %vm785
  %788 = vset.pattern.permute.xlu0 73
  %789 = vperm.xlu0 %788, %v780
  %v790 = vpop.permute.xlu0 %789
  %v792 = vsel %vm786, %v670, %v790
  %v793 = vsel %vm783, %v225, %v792
  %794 = vst [vmem:[%s3] sm:$0xff] %v793
  // Predicated region
  $region14: #{transformer_model_forward.1} parent=0 // pred_check
    _
  $region15: #{transformer_model_forward.1} parent=0 // pred_check_branch
    %796 = sbr.rel (0) target = $region17
  $region16: #{transformer_model_forward.1} parent=0 // pred_region
    _
  $region17: #{transformer_model_forward.1} parent=0 // pred_fallthru
    _
  // Predicated region
  $region18: #{transformer_model_forward.1} parent=0 // pred_check
    _
  $region19: #{transformer_model_forward.1} parent=0 // pred_check_branch
    %798 = sbr.rel (0) target = $region21
  $region20: #{transformer_model_forward.1} parent=0 // pred_region
    _
  $region21: #{transformer_model_forward.1} parent=0 // pred_fallthru
    _

</llo_original>
